<compile_context>
chip_gen: v7x
topology: tpu7x:2x2x1
jax: 0.10.0
libtpu: 0.0.40
codegen_flags: <defaults>
</compile_context>

<pallas_src>
import jax
import jax.numpy as jnp
from jax.experimental import pallas as pl
from jax.experimental.pallas import tpu as pltpu


def _gnn_kernel(a_ref, x_ref, w1_ref, b1_ref, w2_ref, b2_ref, out_ref):
    """Fused 2-layer GCN + mean-node readout for one graph (all operands in VMEM)."""
    a = a_ref[...]                                     # (N, N) normalized adjacency
    x = x_ref[...]                                     # (N, F_in)

    # ---- GraphConv 1:  (A_hat @ X) @ W1 + b1, then ReLU ---------------------
    # Reordered (aggregate first) because F_in < hidden: N*N*F_in + N*F_in*H MACs
    # instead of N*F_in*H + N*N*H.
    ax = jnp.dot(a, x, preferred_element_type=jnp.float32)               # (N, F_in)
    h1 = jnp.dot(ax, w1_ref[...], preferred_element_type=jnp.float32)    # (N, H)
    h1 = jnp.maximum(h1 + b1_ref[...], 0.0)

    # ---- GraphConv 2 + mean_nodes, folded -----------------------------------
    #   mean_n(A_hat @ H1 @ W2 + b2) = ((1/N) 1^T A_hat) @ H1 @ W2 + b2
    v = jnp.mean(a, axis=0, keepdims=True)                               # (1, N)
    vh = jnp.dot(v, h1, preferred_element_type=jnp.float32)              # (1, H)
    out_ref[...] = (
        jnp.dot(vh, w2_ref[...], preferred_element_type=jnp.float32)     # (1, F_out)
        + b2_ref[...]
    )


def gnn_encoder_forward(a_hat, x, w1, b1, w2, b2):
    """Batched GNNEncoder forward.

    a_hat: (B, N, N)  normalized adjacency (with self-loops) per graph
    x:     (B, N, F_in) node features per graph
    w1:    (F_in, H)   b1: (H,)
    w2:    (H, F_out)  b2: (F_out,)
    returns: (B, F_out) mean-node readout per graph
    """
    b, n, f_in = x.shape
    hidden = w1.shape[1]
    f_out = w2.shape[1]

    b1_2d = b1.reshape(1, hidden)
    b2_2d = b2.reshape(1, f_out)

    out = pl.pallas_call(
        _gnn_kernel,
        out_shape=jax.ShapeDtypeStruct((b, 1, f_out), jnp.float32),
        grid=(b,),
        in_specs=[
            # Per-graph blocks (leading batch dim squeezed out of the kernel ref).
            pl.BlockSpec((None, n, n), lambda g: (g, 0, 0)),
            pl.BlockSpec((None, n, f_in), lambda g: (g, 0, 0)),
            # Weights / biases: constant index_map => DMA'd once, VMEM-resident.
            pl.BlockSpec((f_in, hidden), lambda g: (0, 0)),
            pl.BlockSpec((1, hidden), lambda g: (0, 0)),
            pl.BlockSpec((hidden, f_out), lambda g: (0, 0)),
            pl.BlockSpec((1, f_out), lambda g: (0, 0)),
        ],
        out_specs=pl.BlockSpec((None, 1, f_out), lambda g: (g, 0, 0)),
        compiler_params=pltpu.CompilerParams(
            dimension_semantics=("parallel",)),
    )(a_hat, x, w1, b1_2d, w2, b2_2d)

    return out.reshape(b, f_out)


def _reference(a_hat, x, w1, b1, w2, b2):
    """Pure-JAX reference matching the DGL module's math (original op order)."""
    def one(a, feat):
        h1 = jnp.maximum(a @ feat @ w1 + b1.reshape(1, -1), 0.0)
        h2 = a @ h1 @ w2 + b2.reshape(1, -1)
        return jnp.mean(h2, axis=0)
    return jax.vmap(one)(a_hat, x)


def _make_graph(key, n):
    """Random symmetric adjacency with self-loops, symmetrically normalized."""
    upper = (jax.random.uniform(key, (n, n)) > 0.7).astype(jnp.float32)
    adj = jnp.triu(upper, 1)
    adj = adj + adj.T + jnp.eye(n, dtype=jnp.float32)
    deg = jnp.sum(adj, axis=1)
    d_inv_sqrt = 1.0 / jnp.sqrt(deg)
    return (d_inv_sqrt[:, None] * adj * d_inv_sqrt[None, :]).astype(jnp.float32)


if __name__ == "__main__":
    key = jax.random.PRNGKey(0)
    k_adj, k_x, k_w1, k_w2 = jax.random.split(key, 4)

    # Small batch of graphs: B graphs, N nodes, in_feats -> hidden -> out_feats
    B, N, in_feats, hidden_dim, out_feats = 4, 16, 8, 32, 16

    adj_keys = jax.random.split(k_adj, B)
    a_hat = jnp.stack([_make_graph(k, N) for k in adj_keys])            # (B, N, N)

    x = jax.random.normal(k_x, (B, N, in_feats), dtype=jnp.float32)     # (B, N, F_in)
    w1 = jax.random.normal(k_w1, (in_feats, hidden_dim), dtype=jnp.float32) * 0.2
    b1 = jnp.zeros((hidden_dim,), dtype=jnp.float32)
    w2 = jax.random.normal(k_w2, (hidden_dim, out_feats), dtype=jnp.float32) * 0.2
    b2 = jnp.zeros((out_feats,), dtype=jnp.float32)

    out = gnn_encoder_forward(a_hat, x, w1, b1, w2, b2)
    jax.block_until_ready(out)

    ref = _reference(a_hat, x, w1, b1, w2, b2)
    assert out.shape == (B, out_feats)
    assert jnp.allclose(out, ref, atol=1e-4, rtol=1e-4)

    print("KERNEL_OK")
</pallas_src>

<mosaic_0001>
module attributes {stable_mosaic.version = 11 : i64} {
  func.func @_gnn_kernel(%arg0: i32, %arg1: memref<1x16x16xf32, #tpu.memory_space<vmem>>, %arg2: memref<1x16x8xf32, #tpu.memory_space<vmem>>, %arg3: memref<8x32xf32, #tpu.memory_space<vmem>>, %arg4: memref<1x32xf32, #tpu.memory_space<vmem>>, %arg5: memref<32x16xf32, #tpu.memory_space<vmem>>, %arg6: memref<1x16xf32, #tpu.memory_space<vmem>>, %arg7: memref<1x1x16xf32, #tpu.memory_space<vmem>>) attributes {dimension_semantics = [#tpu.dimension_semantics<parallel>], iteration_bounds = array<i64: 4>, scalar_prefetch = 0 : i64, scratch_operands = 0 : i64, tpu.core_type = #tpu.core_type<tc>, window_params = [{transform_indices = @transform_0, window_bounds = array<i64: 1, 16, 16>}, {transform_indices = @transform_1, window_bounds = array<i64: 1, 16, 8>}, {pipeline_mode = #tpu.pipeline_mode<synchronous>, transform_indices = @transform_2, window_bounds = array<i64: 8, 32>}, {pipeline_mode = #tpu.pipeline_mode<synchronous>, transform_indices = @transform_3, window_bounds = array<i64: 1, 32>}, {pipeline_mode = #tpu.pipeline_mode<synchronous>, transform_indices = @transform_4, window_bounds = array<i64: 32, 16>}, {pipeline_mode = #tpu.pipeline_mode<synchronous>, transform_indices = @transform_5, window_bounds = array<i64: 1, 16>}, {transform_indices = @transform_6, window_bounds = array<i64: 1, 1, 16>}]} {
    %c0 = arith.constant 0 : index
    %c0_0 = arith.constant 0 : index
    %c0_1 = arith.constant 0 : index
    %0 = vector.load %arg1[%c0, %c0_0, %c0_1] : memref<1x16x16xf32, #tpu.memory_space<vmem>>, vector<1x16x16xf32>
    %1 = vector.shape_cast %0 : vector<1x16x16xf32> to vector<16x16xf32>
    %c0_2 = arith.constant 0 : index
    %c0_3 = arith.constant 0 : index
    %c0_4 = arith.constant 0 : index
    %2 = vector.load %arg2[%c0_2, %c0_3, %c0_4] : memref<1x16x8xf32, #tpu.memory_space<vmem>>, vector<1x16x8xf32>
    %3 = vector.shape_cast %2 : vector<1x16x8xf32> to vector<16x8xf32>
    %cst = arith.constant dense<0.000000e+00> : vector<16x8xf32>
    %4 = tpu.matmul %1, %3, %cst {dimension_numbers = #tpu.dot_dimension_numbers<[1], [0], [0], [1], [0, 0, 1, 1], [], []>} : vector<16x16xf32>, vector<16x8xf32>, vector<16x8xf32> -> vector<16x8xf32>
    %c0_5 = arith.constant 0 : index
    %c0_6 = arith.constant 0 : index
    %5 = vector.load %arg3[%c0_5, %c0_6] : memref<8x32xf32, #tpu.memory_space<vmem>>, vector<8x32xf32>
    %cst_7 = arith.constant dense<0.000000e+00> : vector<16x32xf32>
    %6 = tpu.matmul %4, %5, %cst_7 {dimension_numbers = #tpu.dot_dimension_numbers<[1], [0], [0], [1], [0, 0, 1, 1], [], []>} : vector<16x8xf32>, vector<8x32xf32>, vector<16x32xf32> -> vector<16x32xf32>
    %c0_8 = arith.constant 0 : index
    %c0_9 = arith.constant 0 : index
    %7 = vector.load %arg4[%c0_8, %c0_9] : memref<1x32xf32, #tpu.memory_space<vmem>>, vector<1x32xf32>
    %8 = vector.broadcast %7 : vector<1x32xf32> to vector<16x32xf32>
    %9 = arith.addf %6, %8 : vector<16x32xf32>
    %cst_10 = arith.constant 0.000000e+00 : f32
    %10 = vector.broadcast %cst_10 : f32 to vector<16x32xf32>
    %11 = arith.maximumf %9, %10 : vector<16x32xf32>
    %cst_11 = arith.constant dense<0.000000e+00> : vector<16xf32>
    %12 = vector.multi_reduction <add>, %1, %cst_11 [0] : vector<16x16xf32> to vector<16xf32>
    %13 = vector.shape_cast %12 : vector<16xf32> to vector<1x16xf32>
    %cst_12 = arith.constant 1.600000e+01 : f32
    %14 = vector.broadcast %cst_12 : f32 to vector<1x16xf32>
    %15 = arith.divf %13, %14 : vector<1x16xf32>
    %cst_13 = arith.constant dense<0.000000e+00> : vector<1x32xf32>
    %16 = tpu.matmul %15, %11, %cst_13 {dimension_numbers = #tpu.dot_dimension_numbers<[1], [0], [0], [1], [0, 0, 1, 1], [], []>} : vector<1x16xf32>, vector<16x32xf32>, vector<1x32xf32> -> vector<1x32xf32>
    %c0_14 = arith.constant 0 : index
    %c0_15 = arith.constant 0 : index
    %17 = vector.load %arg5[%c0_14, %c0_15] : memref<32x16xf32, #tpu.memory_space<vmem>>, vector<32x16xf32>
    %cst_16 = arith.constant dense<0.000000e+00> : vector<1x16xf32>
    %18 = tpu.matmul %16, %17, %cst_16 {dimension_numbers = #tpu.dot_dimension_numbers<[1], [0], [0], [1], [0, 0, 1, 1], [], []>} : vector<1x32xf32>, vector<32x16xf32>, vector<1x16xf32> -> vector<1x16xf32>
    %c0_17 = arith.constant 0 : index
    %c0_18 = arith.constant 0 : index
    %19 = vector.load %arg6[%c0_17, %c0_18] : memref<1x16xf32, #tpu.memory_space<vmem>>, vector<1x16xf32>
    %20 = arith.addf %18, %19 : vector<1x16xf32>
    %c0_19 = arith.constant 0 : index
    %c0_20 = arith.constant 0 : index
    %c0_21 = arith.constant 0 : index
    %21 = vector.load %arg7[%c0_19, %c0_20, %c0_21] : memref<1x1x16xf32, #tpu.memory_space<vmem>>, vector<1x1x16xf32>
    %22 = vector.shape_cast %21 : vector<1x1x16xf32> to vector<1x16xf32>
    %23 = vector.shape_cast %20 : vector<1x16xf32> to vector<1x1x16xf32>
    tpu.vector_store %arg7[%c0_19, %c0_20, %c0_21], %23 {strides = array<i32>} : memref<1x1x16xf32, #tpu.memory_space<vmem>>, vector<1x1x16xf32>,
    return
  }
  func.func @transform_0(%arg0: i32) -> (i32, i32, i32) {
    %c0_i32 = arith.constant 0 : i32
    %c0_i32_0 = arith.constant 0 : i32
    %c0_i32_1 = arith.constant 0 : i32
    return %arg0, %c0_i32, %c0_i32_0 : i32, i32, i32
  }
  func.func @transform_1(%arg0: i32) -> (i32, i32, i32) {
    %c0_i32 = arith.constant 0 : i32
    %c0_i32_0 = arith.constant 0 : i32
    %c0_i32_1 = arith.constant 0 : i32
    return %arg0, %c0_i32, %c0_i32_0 : i32, i32, i32
  }
  func.func @transform_2(%arg0: i32) -> (i32, i32) {
    %c0_i32 = arith.constant 0 : i32
    %c0_i32_0 = arith.constant 0 : i32
    %c0_i32_1 = arith.constant 0 : i32
    return %c0_i32, %c0_i32_0 : i32, i32
  }
  func.func @transform_3(%arg0: i32) -> (i32, i32) {
    %c0_i32 = arith.constant 0 : i32
    %c0_i32_0 = arith.constant 0 : i32
    %c0_i32_1 = arith.constant 0 : i32
    return %c0_i32, %c0_i32_0 : i32, i32
  }
  func.func @transform_4(%arg0: i32) -> (i32, i32) {
    %c0_i32 = arith.constant 0 : i32
    %c0_i32_0 = arith.constant 0 : i32
    %c0_i32_1 = arith.constant 0 : i32
    return %c0_i32, %c0_i32_0 : i32, i32
  }
  func.func @transform_5(%arg0: i32) -> (i32, i32) {
    %c0_i32 = arith.constant 0 : i32
    %c0_i32_0 = arith.constant 0 : i32
    %c0_i32_1 = arith.constant 0 : i32
    return %c0_i32, %c0_i32_0 : i32, i32
  }
  func.func @transform_6(%arg0: i32) -> (i32, i32, i32) {
    %c0_i32 = arith.constant 0 : i32
    %c0_i32_0 = arith.constant 0 : i32
    %c0_i32_1 = arith.constant 0 : i32
    return %arg0, %c0_i32, %c0_i32_0 : i32, i32, i32
  }
}

</mosaic_0001>

<llo_original>
// kernel: tpu_custom_call.1
$region0: #{tpu_custom_call.1}
  #allocation0 [shape = 'u32[]', space=smem, size = 0x4, offset = 0x4, fixed_abs, tag = 'smem constant byte address 0x4 - core index']
  #allocation1 [shape = 'u32[144,128]{1,0:T(1,128)}', space=vmem, size = 0x12000, scoped, tag = 'internal scratch']
  %s0 = inlined_call_operand.vmem [shape: f32[4,16,16], index: 0, kind: input, shape index: {}]
  %s1 = inlined_call_operand.vmem [shape: f32[4,16,8], index: 1, kind: input, shape index: {}]
  %s2 = inlined_call_operand.vmem [shape: f32[8,32], index: 2, kind: input, shape index: {}]
  %s3 = inlined_call_operand.vmem [shape: f32[1,32], index: 3, kind: input, shape index: {}]
  %s4 = inlined_call_operand.vmem [shape: f32[32,16], index: 4, kind: input, shape index: {}]
  %s5 = inlined_call_operand.vmem [shape: f32[1,16], index: 5, kind: input, shape index: {}]
  %s6 = inlined_call_operand.hbm [shape: f32[4,1,16], index: 6, kind: output, shape index: {}]
  %s7 = sld [smem:[#allocation0]]
  $region57: #{tpu_custom_call.1} parent=0
    _
  %s9 = ssub.s32 1, %s7
  %s10 = scalar_select 0, %s9, %s7
  $region1: #{tpu_custom_call.1} parent=0
    #allocation2 [shape = 'u8[1024]{0}', space=vmem, size = 0x400, scoped, tag = 'output window, operand 0']
    #allocation3 [shape = 's32[2]{0}', space=sflag, size = 0x8, scoped, tag = 'scoped memory for tpu_custom_call.1']
    %11 = vsyncpa [#allocation3], 0
    %s12 = scalar_lea.sflag [#allocation3], 1
    %13 = vsyncpa %s12, 0
    loop: start=0, step=1, limit=6
    $region2: #{tpu_custom_call.1} parent=1 // loop_pre_header
      _
    $region3: #{tpu_custom_call.1} parent=1 // loop_header
      %s15 = sphi 0, %s19
      %p16 = scmp.ge.s32.totalorder %s15, 6
      %s25 = sphi 0, %s27
      %s28 = sphi 0, %s25
      %s29 = sphi 0, %s28
      %s45 = sphi 0, %s29
      %s51 = sphi 0, %s53
      %s54 = sphi 0, %s51
      %s55 = sphi 0, %s54
      %s71 = sphi 0, %s55
      %s75 = sphi 0, %s75
      %s77 = sphi 0, %s75
      %s78 = sphi 0, %s77
      %s92 = sphi 0, %s78
      %s96 = sphi 0, %s96
      %s98 = sphi 0, %s96
      %s99 = sphi 0, %s98
      %s113 = sphi 0, %s99
      %s117 = sphi 0, %s117
      %s119 = sphi 0, %s117
      %s120 = sphi 0, %s119
      %s134 = sphi 0, %s120
      %s138 = sphi 0, %s138
      %s140 = sphi 0, %s138
      %s141 = sphi 0, %s140
      %s155 = sphi 0, %s141
      %s161 = sphi 0, %s163
      %s164 = sphi 0, %s161
      %s165 = sphi 0, %s164
      %s181 = sphi 0, %s165
    $region4: #{tpu_custom_call.1} parent=1 // loop_header_branch
      %18 = sbr.rel (%p16) target = $region8
    $region5: #{tpu_custom_call.1} parent=1 // loop_body
      %s20 = ssub.s32 %s15, 1
      %s21 = ssub.s32 %s15, 2
      %s22 = sadd.s32 %s15, 1
      %s23 = ssub.s32 %s15, %s22
      %p24 = scmp.eq.s32.totalorder %s23, 0
      %s26 = sadd.s32 %s25, 1
      %s27 = scalar_select %p24, %s25, %s26
      %p30 = pneg %p24
      %p31 = scmp.eq.s32.totalorder %s15, 3
      %p32 = por %p30, %p31
      %p33 = scmp.ne.s32.totalorder %s25, %s28
      %p34 = scmp.eq.s32.totalorder %s15, 0
      %p35 = por %p33, %p34
      %p36 = scmp.ne.s32.totalorder %s25, %s28
      %p37 = scmp.eq.s32.totalorder %s20, 3
      %p38 = por %p36, %p37
      %p39 = scmp.ne.s32.totalorder %s28, %s29
      %p40 = scmp.eq.s32.totalorder %s20, 0
      %p41 = por %p39, %p40
      %p42 = scmp.ne.s32.totalorder %s28, %s29
      %p43 = scmp.eq.s32.totalorder %s21, 3
      %p44 = por %p42, %p43
      %p46 = scmp.ne.s32.totalorder %s29, %s45
      %p47 = scmp.eq.s32.totalorder %s21, 0
      %p48 = por %p46, %p47
      %s49 = ssub.s32 %s15, %s22
      %p50 = scmp.eq.s32.totalorder %s49, 0
      %s52 = sadd.s32 %s51, 1
      %s53 = scalar_select %p50, %s51, %s52
      %p56 = pneg %p50
      %p57 = scmp.eq.s32.totalorder %s15, 3
      %p58 = por %p56, %p57
      %p59 = scmp.ne.s32.totalorder %s51, %s54
      %p60 = scmp.eq.s32.totalorder %s15, 0
      %p61 = por %p59, %p60
      %p62 = scmp.ne.s32.totalorder %s51, %s54
      %p63 = scmp.eq.s32.totalorder %s20, 3
      %p64 = por %p62, %p63
      %p65 = scmp.ne.s32.totalorder %s54, %s55
      %p66 = scmp.eq.s32.totalorder %s20, 0
      %p67 = por %p65, %p66
      %p68 = scmp.ne.s32.totalorder %s54, %s55
      %p69 = scmp.eq.s32.totalorder %s21, 3
      %p70 = por %p68, %p69
      %p72 = scmp.ne.s32.totalorder %s55, %s71
      %p73 = scmp.eq.s32.totalorder %s21, 0
      %p74 = por %p72, %p73
      %s76 = sadd.s32 %s75, 1
      %p79 = scmp.eq.s32.totalorder %s15, 3
      %p80 = scmp.ne.s32.totalorder %s75, %s77
      %p81 = scmp.eq.s32.totalorder %s15, 0
      %p82 = por %p80, %p81
      %p83 = scmp.ne.s32.totalorder %s75, %s77
      %p84 = scmp.eq.s32.totalorder %s20, 3
      %p85 = por %p83, %p84
      %p86 = scmp.ne.s32.totalorder %s77, %s78
      %p87 = scmp.eq.s32.totalorder %s20, 0
      %p88 = por %p86, %p87
      %p89 = scmp.ne.s32.totalorder %s77, %s78
      %p90 = scmp.eq.s32.totalorder %s21, 3
      %p91 = por %p89, %p90
      %p93 = scmp.ne.s32.totalorder %s78, %s92
      %p94 = scmp.eq.s32.totalorder %s21, 0
      %p95 = por %p93, %p94
      %s97 = sadd.s32 %s96, 1
      %p100 = scmp.eq.s32.totalorder %s15, 3
      %p101 = scmp.ne.s32.totalorder %s96, %s98
      %p102 = scmp.eq.s32.totalorder %s15, 0
      %p103 = por %p101, %p102
      %p104 = scmp.ne.s32.totalorder %s96, %s98
      %p105 = scmp.eq.s32.totalorder %s20, 3
      %p106 = por %p104, %p105
      %p107 = scmp.ne.s32.totalorder %s98, %s99
      %p108 = scmp.eq.s32.totalorder %s20, 0
      %p109 = por %p107, %p108
      %p110 = scmp.ne.s32.totalorder %s98, %s99
      %p111 = scmp.eq.s32.totalorder %s21, 3
      %p112 = por %p110, %p111
      %p114 = scmp.ne.s32.totalorder %s99, %s113
      %p115 = scmp.eq.s32.totalorder %s21, 0
      %p116 = por %p114, %p115
      %s118 = sadd.s32 %s117, 1
      %p121 = scmp.eq.s32.totalorder %s15, 3
      %p122 = scmp.ne.s32.totalorder %s117, %s119
      %p123 = scmp.eq.s32.totalorder %s15, 0
      %p124 = por %p122, %p123
      %p125 = scmp.ne.s32.totalorder %s117, %s119
      %p126 = scmp.eq.s32.totalorder %s20, 3
      %p127 = por %p125, %p126
      %p128 = scmp.ne.s32.totalorder %s119, %s120
      %p129 = scmp.eq.s32.totalorder %s20, 0
      %p130 = por %p128, %p129
      %p131 = scmp.ne.s32.totalorder %s119, %s120
      %p132 = scmp.eq.s32.totalorder %s21, 3
      %p133 = por %p131, %p132
      %p135 = scmp.ne.s32.totalorder %s120, %s134
      %p136 = scmp.eq.s32.totalorder %s21, 0
      %p137 = por %p135, %p136
      %s139 = sadd.s32 %s138, 1
      %p142 = scmp.eq.s32.totalorder %s15, 3
      %p143 = scmp.ne.s32.totalorder %s138, %s140
      %p144 = scmp.eq.s32.totalorder %s15, 0
      %p145 = por %p143, %p144
      %p146 = scmp.ne.s32.totalorder %s138, %s140
      %p147 = scmp.eq.s32.totalorder %s20, 3
      %p148 = por %p146, %p147
      %p149 = scmp.ne.s32.totalorder %s140, %s141
      %p150 = scmp.eq.s32.totalorder %s20, 0
      %p151 = por %p149, %p150
      %p152 = scmp.ne.s32.totalorder %s140, %s141
      %p153 = scmp.eq.s32.totalorder %s21, 3
      %p154 = por %p152, %p153
      %p156 = scmp.ne.s32.totalorder %s141, %s155
      %p157 = scmp.eq.s32.totalorder %s21, 0
      %p158 = por %p156, %p157
      %s159 = ssub.s32 %s15, %s22
      %p160 = scmp.eq.s32.totalorder %s159, 0
      %s162 = sadd.s32 %s161, 1
      %s163 = scalar_select %p160, %s161, %s162
      %p166 = pneg %p160
      %p167 = scmp.eq.s32.totalorder %s15, 3
      %p168 = por %p166, %p167
      %p169 = scmp.ne.s32.totalorder %s161, %s164
      %p170 = scmp.eq.s32.totalorder %s15, 0
      %p171 = por %p169, %p170
      %p172 = scmp.ne.s32.totalorder %s161, %s164
      %p173 = scmp.eq.s32.totalorder %s20, 3
      %p174 = por %p172, %p173
      %p175 = scmp.ne.s32.totalorder %s164, %s165
      %p176 = scmp.eq.s32.totalorder %s20, 0
      %p177 = por %p175, %p176
      %p178 = scmp.ne.s32.totalorder %s164, %s165
      %p179 = scmp.eq.s32.totalorder %s21, 3
      %p180 = por %p178, %p179
      %p182 = scmp.ne.s32.totalorder %s165, %s181
      %p183 = scmp.eq.s32.totalorder %s21, 0
      %p184 = por %p182, %p183
      %p185 = scmp.le.s32.totalorder 1, %s15
      %p186 = scmp.lt.s32.totalorder %s15, 5
      %p187 = pnand %p185, %p186
      %p188 = pneg %p187
      // Predicated region
      $region9: #{tpu_custom_call.1} parent=5 // pred_check
        _
      $region10: #{tpu_custom_call.1} parent=5 // pred_check_branch
        %190 = sbr.rel (%p187) target = $region12
      $region11: #{tpu_custom_call.1} parent=5 // pred_region
        %s191 = ssub.s32 %s15, 1
        // Predicated region
        $region13: #{tpu_custom_call.1} parent=11 // pred_check
          %p192 = pneg %p88
        $region14: #{tpu_custom_call.1} parent=11 // pred_check_branch
          %194 = sbr.rel (%p192) target = $region16
        $region15: #{tpu_custom_call.1} parent=11 // pred_region
          _
        $region16: #{tpu_custom_call.1} parent=11 // pred_fallthru
          _
        // Predicated region
        $region17: #{tpu_custom_call.1} parent=11 // pred_check
          %p195 = pneg %p109
        $region18: #{tpu_custom_call.1} parent=11 // pred_check_branch
          %197 = sbr.rel (%p195) target = $region20
        $region19: #{tpu_custom_call.1} parent=11 // pred_region
          _
        $region20: #{tpu_custom_call.1} parent=11 // pred_fallthru
          _
        // Predicated region
        $region21: #{tpu_custom_call.1} parent=11 // pred_check
          %p198 = pneg %p130
        $region22: #{tpu_custom_call.1} parent=11 // pred_check_branch
          %200 = sbr.rel (%p198) target = $region24
        $region23: #{tpu_custom_call.1} parent=11 // pred_region
          _
        $region24: #{tpu_custom_call.1} parent=11 // pred_fallthru
          _
        // Predicated region
        $region25: #{tpu_custom_call.1} parent=11 // pred_check
          %p201 = pneg %p151
        $region26: #{tpu_custom_call.1} parent=11 // pred_check_branch
          %203 = sbr.rel (%p201) target = $region28
        $region27: #{tpu_custom_call.1} parent=11 // pred_region
          _
        $region28: #{tpu_custom_call.1} parent=11 // pred_fallthru
          _
      $region12: #{tpu_custom_call.1} parent=5 // pred_fallthru
        _
      %p204 = scmp.lt.s32.totalorder %s15, 4
      // Predicated region
      $region29: #{tpu_custom_call.1} parent=5 // pred_check
        %p205 = pneg %p204
      $region30: #{tpu_custom_call.1} parent=5 // pred_check_branch
        %207 = sbr.rel (%p205) target = $region32
      $region31: #{tpu_custom_call.1} parent=5 // pred_region
        // Predicated region
        $region33: #{tpu_custom_call.1} parent=31 // pred_check
          %p208 = pneg %p35
        $region34: #{tpu_custom_call.1} parent=31 // pred_check_branch
          %210 = sbr.rel (%p208) target = $region36
        $region35: #{tpu_custom_call.1} parent=31 // pred_region
          %p211 = scmp.lt.s32.totalorder %s15, 3
          %s212 = scalar_select %p211, %s15, 3
          %s213 = smul.addr %s212, 2
          %s214 = smul.addr %s213, 8
          %s215 = scalar_lea.vmem %s0, %s214
        $region36: #{tpu_custom_call.1} parent=31 // pred_fallthru
          _
        // Predicated region
        $region37: #{tpu_custom_call.1} parent=31 // pred_check
          %p216 = pneg %p61
        $region38: #{tpu_custom_call.1} parent=31 // pred_check_branch
          %218 = sbr.rel (%p216) target = $region40
        $region39: #{tpu_custom_call.1} parent=31 // pred_region
          %p219 = scmp.lt.s32.totalorder %s15, 3
          %s220 = scalar_select %p219, %s15, 3
          %s221 = smul.addr %s220, 2
          %s222 = smul.addr %s221, 8
          %s223 = scalar_lea.vmem %s1, %s222
        $region40: #{tpu_custom_call.1} parent=31 // pred_fallthru
          _
      $region32: #{tpu_custom_call.1} parent=5 // pred_fallthru
        _
      %p224 = scmp.le.s32.totalorder 1, %s15
      %p225 = scmp.lt.s32.totalorder %s15, 5
      %p226 = pnand %p224, %p225
      %p227 = pneg %p226
      // Predicated region
      $region41: #{tpu_custom_call.1} parent=5 // pred_check
        _
      $region42: #{tpu_custom_call.1} parent=5 // pred_check_branch
        %229 = sbr.rel (%p226) target = $region44
      $region43: #{tpu_custom_call.1} parent=5 // pred_region
        %s230 = ssub.s32 %s15, 1
        %p231 = scmp.lt.s32.totalorder %s20, 3
        %s232 = scalar_select %p231, %s20, 3
        %s233 = smul.addr %s232, 2
        %s234 = smul.addr %s233, 8
        %s235 = scalar_lea.vmem %s0, %s234
        %p236 = pneg %p41
        %p237 = pneg %p38
        %p238 = scmp.lt.s32.totalorder %s20, 3
        %s239 = scalar_select %p238, %s20, 3
        %s240 = smul.addr %s239, 2
        %s241 = smul.addr %s240, 8
        %s242 = scalar_lea.vmem %s1, %s241
        %p243 = pneg %p67
        %p244 = pneg %p64
        %p245 = pneg %p88
        %p246 = pneg %p85
        %p247 = pneg %p109
        %p248 = pneg %p106
        %p249 = pneg %p130
        %p250 = pneg %p127
        %p251 = pneg %p151
        %p252 = pneg %p148
        %p253 = pneg %p177
        %p254 = pneg %p174
        %s255 = sand.u32 %s164, 1
        %s256 = scalar_lea.sflag [#allocation3], %s255
        %s257 = sand.u32 %s164, 1
        %s258 = scalar_lea.vmem [#allocation2], %s257
        %p259 = scmp.lt.s32.totalorder %s20, 3
        %s260 = scalar_select %p259, %s20, 3
        %s261 = smul.addr %s260, 2
        %s262 = smul.addr %s261, 8
        %s263 = scalar_lea.vmem %s0, %s262
        %p264 = scmp.lt.s32.totalorder %s20, 3
        %s265 = scalar_select %p264, %s20, 3
        %s266 = smul.addr %s265, 2
        %s267 = smul.addr %s266, 8
        %s268 = scalar_lea.vmem %s1, %s267
        %v269 = vld [vmem:[%s263] sm:$0xff]
        %v270 = vld [vmem:[%s263 + $0x8] sm:$0xff]
        %v271 = vld [vmem:[%s268] sm:$0xff]
        %v272 = vld [vmem:[%s268 + $0x8] sm:$0xff]
        %vm273 = vcmask 130048
        %v275 = vsel %vm273, %v269, 0
        %v278 = vsel %vm273, %v270, 0
        %280 = vmatprep.subr.mxu0 0.0
        %281 = vmatpush1.msra.mxu0 %v271
        %282 = vmatprep.subr.mxu0 0.0
        %283 = vmatpush1.msra.mxu0 %v272
        %284 = vmatprep.subr.mxu0 0.0
        %285 = vmatpush1.msra.mxu0 0.0
        %286 = vmatprep.subr.mxu0 0.0
        %287 = vmatpush1.msra.mxu0 0.0
        %288 = vmatprep.subr.mxu0 0.0
        %289 = vmatpush1.msra.mxu0 0.0
        %290 = vmatprep.subr.mxu0 0.0
        %291 = vmatpush1.msra.mxu0 0.0
        %292 = vmatprep.subr.mxu0 0.0
        %293 = vmatpush1.msra.mxu0 0.0
        %294 = vmatprep.subr.mxu0 0.0
        %295 = vmatpush1.msra.mxu0 0.0
        %296 = vmatprep.subr.mxu0 0.0
        %297 = vmatpush1.msra.mxu0 0.0
        %298 = vmatprep.subr.mxu0 0.0
        %299 = vmatpush1.msra.mxu0 0.0
        %300 = vmatprep.subr.mxu0 0.0
        %301 = vmatpush1.msra.mxu0 0.0
        %302 = vmatprep.subr.mxu0 0.0
        %303 = vmatpush1.msra.mxu0 0.0
        %304 = vmatprep.subr.mxu0 0.0
        %305 = vmatpush1.msra.mxu0 0.0
        %306 = vmatprep.subr.mxu0 0.0
        %307 = vmatpush1.msra.mxu0 0.0
        %308 = vmatprep.subr.mxu0 0.0
        %309 = vmatpush1.msra.mxu0 0.0
        %310 = vmatprep.subr.mxu0 0.0
        %311 = vmatpush1.msra.mxu0 0.0
        %312 = vmatprep.subr.mxu0 0.0
        %313 = vmatpush1.msra.mxu0 0.0
        %314 = vmatprep.subr.mxu0 0.0
        %315 = vmatpush1.msra.mxu0 0.0
        %316 = vmatprep.subr.mxu0 0.0
        %317 = vmatpush1.msra.mxu0 0.0
        %318 = vmatprep.subr.mxu0 0.0
        %319 = vmatpush1.msra.mxu0 0.0
        %320 = vmatprep.subr.mxu0 0.0
        %321 = vmatpush1.msra.mxu0 0.0
        %322 = vmatprep.subr.mxu0 0.0
        %323 = vmatpush1.msra.mxu0 0.0
        %324 = vmatprep.subr.mxu0 0.0
        %325 = vmatpush1.msra.mxu0 0.0
        %326 = vmatprep.subr.mxu0 0.0
        %327 = vmatpush1.msra.mxu0 0.0
        %328 = vmatprep.subr.mxu0 0.0
        %329 = vmatpush1.msra.mxu0 0.0
        %330 = vmatprep.subr.mxu0 0.0
        %331 = vmatpush1.msra.mxu0 0.0
        %332 = vmatprep.subr.mxu0 0.0
        %333 = vmatpush1.msra.mxu0 0.0
        %334 = vmatprep.subr.mxu0 0.0
        %335 = vmatpush1.msra.mxu0 0.0
        %336 = vmatprep.subr.mxu0 0.0
        %337 = vmatpush1.msra.mxu0 0.0
        %338 = vmatprep.subr.mxu0 0.0
        %339 = vmatpush1.msra.mxu0 0.0
        %340 = vmatprep.subr.mxu0 0.0
        %341 = vmatpush1.msra.mxu0 0.0
        %342 = vmatprep.subr.mxu0 0.0
        %343 = vmatpush1.msra.mxu0 0.0
        %344 = vmatprep.mubr.f32.mxu0 0.0
        %345 = vmatmul.mubr.f32.gmra.mrb[0].mxu0 %v275
        %v346 = vpop.f32.mrb[0].mxu0
        %v347 = vadd.f32 0.0, %v346
        %v348 = vpop.f32.mrb[0].mxu0
        %349 = vmatprep.mubr.f32.mxu0 0.0
        %350 = vmatmul.mubr.f32.gmra.mrb[0].mxu0 %v278
        %v351 = vpop.f32.mrb[0].mxu0
        %v352 = vadd.f32 0.0, %v351
        %v353 = vpop.f32.mrb[0].mxu0
        %354 = vdwg.mxu0
        %v355 = vld [vmem:[%s2] sm:$0xff]
        %v356 = vld [vmem:[%s3] sm:$0x1]
        %v358 = vlaneseq
        %v359 = vshrl.u32 %v358, 7
        %v360 = vsub.s32 0, %v359
        %v361 = vrot.slane %v356, %v360
        %vm363 = vcmask 64512
        %v365 = vsel %vm363, %v347, 0
        %v368 = vsel %vm363, %v352, 0
        %370 = vmatprep.subr.mxu0 0.0
        %371 = vmatpush1.msra.mxu0 %v355
        %372 = vmatprep.subr.mxu0 0.0
        %373 = vmatpush1.msra.mxu0 0.0
        %374 = vmatprep.subr.mxu0 0.0
        %375 = vmatpush1.msra.mxu0 0.0
        %376 = vmatprep.subr.mxu0 0.0
        %377 = vmatpush1.msra.mxu0 0.0
        %378 = vmatprep.subr.mxu0 0.0
        %379 = vmatpush1.msra.mxu0 0.0
        %380 = vmatprep.subr.mxu0 0.0
        %381 = vmatpush1.msra.mxu0 0.0
        %382 = vmatprep.subr.mxu0 0.0
        %383 = vmatpush1.msra.mxu0 0.0
        %384 = vmatprep.subr.mxu0 0.0
        %385 = vmatpush1.msra.mxu0 0.0
        %386 = vmatprep.subr.mxu0 0.0
        %387 = vmatpush1.msra.mxu0 0.0
        %388 = vmatprep.subr.mxu0 0.0
        %389 = vmatpush1.msra.mxu0 0.0
        %390 = vmatprep.subr.mxu0 0.0
        %391 = vmatpush1.msra.mxu0 0.0
        %392 = vmatprep.subr.mxu0 0.0
        %393 = vmatpush1.msra.mxu0 0.0
        %394 = vmatprep.subr.mxu0 0.0
        %395 = vmatpush1.msra.mxu0 0.0
        %396 = vmatprep.subr.mxu0 0.0
        %397 = vmatpush1.msra.mxu0 0.0
        %398 = vmatprep.subr.mxu0 0.0
        %399 = vmatpush1.msra.mxu0 0.0
        %400 = vmatprep.subr.mxu0 0.0
        %401 = vmatpush1.msra.mxu0 0.0
        %402 = vmatprep.subr.mxu0 0.0
        %403 = vmatpush1.msra.mxu0 0.0
        %404 = vmatprep.subr.mxu0 0.0
        %405 = vmatpush1.msra.mxu0 0.0
        %406 = vmatprep.subr.mxu0 0.0
        %407 = vmatpush1.msra.mxu0 0.0
        %408 = vmatprep.subr.mxu0 0.0
        %409 = vmatpush1.msra.mxu0 0.0
        %410 = vmatprep.subr.mxu0 0.0
        %411 = vmatpush1.msra.mxu0 0.0
        %412 = vmatprep.subr.mxu0 0.0
        %413 = vmatpush1.msra.mxu0 0.0
        %414 = vmatprep.subr.mxu0 0.0
        %415 = vmatpush1.msra.mxu0 0.0
        %416 = vmatprep.subr.mxu0 0.0
        %417 = vmatpush1.msra.mxu0 0.0
        %418 = vmatprep.subr.mxu0 0.0
        %419 = vmatpush1.msra.mxu0 0.0
        %420 = vmatprep.subr.mxu0 0.0
        %421 = vmatpush1.msra.mxu0 0.0
        %422 = vmatprep.subr.mxu0 0.0
        %423 = vmatpush1.msra.mxu0 0.0
        %424 = vmatprep.subr.mxu0 0.0
        %425 = vmatpush1.msra.mxu0 0.0
        %426 = vmatprep.subr.mxu0 0.0
        %427 = vmatpush1.msra.mxu0 0.0
        %428 = vmatprep.subr.mxu0 0.0
        %429 = vmatpush1.msra.mxu0 0.0
        %430 = vmatprep.subr.mxu0 0.0
        %431 = vmatpush1.msra.mxu0 0.0
        %432 = vmatprep.subr.mxu0 0.0
        %433 = vmatpush1.msra.mxu0 0.0
        %434 = vmatprep.mubr.f32.mxu0 0.0
        %435 = vmatmul.mubr.f32.gmra.mrb[0].mxu0 %v365
        %v436 = vpop.f32.mrb[0].mxu0
        %v437 = vadd.f32 %v361, %v436
        %v438 = vpop.f32.mrb[0].mxu0
        %439 = vmatprep.mubr.f32.mxu0 0.0
        %440 = vmatmul.mubr.f32.gmra.mrb[0].mxu0 %v368
        %v441 = vpop.f32.mrb[0].mxu0
        %v442 = vadd.f32 %v361, %v441
        %v443 = vpop.f32.mrb[0].mxu0
        %444 = vdwg.mxu0
        %v445 = vmax.f32 %v437, 0.0
        %v446 = vmax.f32 %v442, 0.0
        %v447 = vsel %vm273, %v269, 0.0
        %v448 = vsel %vm273, %v270, 0.0
        %v449 = vadd.f32 %v447, %v448
        %v450 = vrot.slane %v449, 4
        %v451 = vadd.f32 %v449, %v450
        %v452 = vrot.slane %v451, 2
        %v453 = vadd.f32 %v451, %v452
        %v454 = vrot.slane %v453, 1
        %v455 = vadd.f32 %v453, %v454
        %v456 = vrcp.pop 16.0
        %v457 = vmul.f32 %v455, %v456
        %v459 = vsel %vm273, %v457, 0
        %461 = vmatprep.subr.mxu0 0.0
        %462 = vmatpush1.msra.mxu0 %v445
        %463 = vmatprep.subr.mxu0 0.0
        %464 = vmatpush1.msra.mxu0 %v446
        %465 = vmatprep.subr.mxu0 0.0
        %466 = vmatpush1.msra.mxu0 0.0
        %467 = vmatprep.subr.mxu0 0.0
        %468 = vmatpush1.msra.mxu0 0.0
        %469 = vmatprep.subr.mxu0 0.0
        %470 = vmatpush1.msra.mxu0 0.0
        %471 = vmatprep.subr.mxu0 0.0
        %472 = vmatpush1.msra.mxu0 0.0
        %473 = vmatprep.subr.mxu0 0.0
        %474 = vmatpush1.msra.mxu0 0.0
        %475 = vmatprep.subr.mxu0 0.0
        %476 = vmatpush1.msra.mxu0 0.0
        %477 = vmatprep.subr.mxu0 0.0
        %478 = vmatpush1.msra.mxu0 0.0
        %479 = vmatprep.subr.mxu0 0.0
        %480 = vmatpush1.msra.mxu0 0.0
        %481 = vmatprep.subr.mxu0 0.0
        %482 = vmatpush1.msra.mxu0 0.0
        %483 = vmatprep.subr.mxu0 0.0
        %484 = vmatpush1.msra.mxu0 0.0
        %485 = vmatprep.subr.mxu0 0.0
        %486 = vmatpush1.msra.mxu0 0.0
        %487 = vmatprep.subr.mxu0 0.0
        %488 = vmatpush1.msra.mxu0 0.0
        %489 = vmatprep.subr.mxu0 0.0
        %490 = vmatpush1.msra.mxu0 0.0
        %491 = vmatprep.subr.mxu0 0.0
        %492 = vmatpush1.msra.mxu0 0.0
        %493 = vmatprep.subr.mxu0 0.0
        %494 = vmatpush1.msra.mxu0 0.0
        %495 = vmatprep.subr.mxu0 0.0
        %496 = vmatpush1.msra.mxu0 0.0
        %497 = vmatprep.subr.mxu0 0.0
        %498 = vmatpush1.msra.mxu0 0.0
        %499 = vmatprep.subr.mxu0 0.0
        %500 = vmatpush1.msra.mxu0 0.0
        %501 = vmatprep.subr.mxu0 0.0
        %502 = vmatpush1.msra.mxu0 0.0
        %503 = vmatprep.subr.mxu0 0.0
        %504 = vmatpush1.msra.mxu0 0.0
        %505 = vmatprep.subr.mxu0 0.0
        %506 = vmatpush1.msra.mxu0 0.0
        %507 = vmatprep.subr.mxu0 0.0
        %508 = vmatpush1.msra.mxu0 0.0
        %509 = vmatprep.subr.mxu0 0.0
        %510 = vmatpush1.msra.mxu0 0.0
        %511 = vmatprep.subr.mxu0 0.0
        %512 = vmatpush1.msra.mxu0 0.0
        %513 = vmatprep.subr.mxu0 0.0
        %514 = vmatpush1.msra.mxu0 0.0
        %515 = vmatprep.subr.mxu0 0.0
        %516 = vmatpush1.msra.mxu0 0.0
        %517 = vmatprep.subr.mxu0 0.0
        %518 = vmatpush1.msra.mxu0 0.0
        %519 = vmatprep.subr.mxu0 0.0
        %520 = vmatpush1.msra.mxu0 0.0
        %521 = vmatprep.subr.mxu0 0.0
        %522 = vmatpush1.msra.mxu0 0.0
        %523 = vmatprep.subr.mxu0 0.0
        %524 = vmatpush1.msra.mxu0 0.0
        %525 = vmatprep.mubr.f32.mxu0 0.0
        %526 = vmatmul.mubr.f32.gmra.mrb[0].mxu0 %v459
        %v527 = vpop.f32.mrb[0].mxu0
        %v528 = vadd.f32 0.0, %v527
        %v529 = vpop.f32.mrb[0].mxu0
        %530 = vdwg.mxu0
        %v531 = vld [vmem:[%s4] sm:$0xff]
        %v532 = vld [vmem:[%s4 + $0x8] sm:$0xff]
        %v533 = vld [vmem:[%s4 + $0x10] sm:$0xff]
        %v534 = vld [vmem:[%s4 + $0x18] sm:$0xff]
        %v535 = vld [vmem:[%s5] sm:$0x1]
        %vm536 = vcmask 261120
        %v538 = vsel %vm536, %v528, 0
        %540 = vmatprep.subr.mxu0 0.0
        %541 = vmatpush1.msra.mxu0 %v531
        %542 = vmatprep.subr.mxu0 0.0
        %543 = vmatpush1.msra.mxu0 %v532
        %544 = vmatprep.subr.mxu0 0.0
        %545 = vmatpush1.msra.mxu0 %v533
        %546 = vmatprep.subr.mxu0 0.0
        %547 = vmatpush1.msra.mxu0 %v534
        %548 = vmatprep.subr.mxu0 0.0
        %549 = vmatpush1.msra.mxu0 0.0
        %550 = vmatprep.subr.mxu0 0.0
        %551 = vmatpush1.msra.mxu0 0.0
        %552 = vmatprep.subr.mxu0 0.0
        %553 = vmatpush1.msra.mxu0 0.0
        %554 = vmatprep.subr.mxu0 0.0
        %555 = vmatpush1.msra.mxu0 0.0
        %556 = vmatprep.subr.mxu0 0.0
        %557 = vmatpush1.msra.mxu0 0.0
        %558 = vmatprep.subr.mxu0 0.0
        %559 = vmatpush1.msra.mxu0 0.0
        %560 = vmatprep.subr.mxu0 0.0
        %561 = vmatpush1.msra.mxu0 0.0
        %562 = vmatprep.subr.mxu0 0.0
        %563 = vmatpush1.msra.mxu0 0.0
        %564 = vmatprep.subr.mxu0 0.0
        %565 = vmatpush1.msra.mxu0 0.0
        %566 = vmatprep.subr.mxu0 0.0
        %567 = vmatpush1.msra.mxu0 0.0
        %568 = vmatprep.subr.mxu0 0.0
        %569 = vmatpush1.msra.mxu0 0.0
        %570 = vmatprep.subr.mxu0 0.0
        %571 = vmatpush1.msra.mxu0 0.0
        %572 = vmatprep.subr.mxu0 0.0
        %573 = vmatpush1.msra.mxu0 0.0
        %574 = vmatprep.subr.mxu0 0.0
        %575 = vmatpush1.msra.mxu0 0.0
        %576 = vmatprep.subr.mxu0 0.0
        %577 = vmatpush1.msra.mxu0 0.0
        %578 = vmatprep.subr.mxu0 0.0
        %579 = vmatpush1.msra.mxu0 0.0
        %580 = vmatprep.subr.mxu0 0.0
        %581 = vmatpush1.msra.mxu0 0.0
        %582 = vmatprep.subr.mxu0 0.0
        %583 = vmatpush1.msra.mxu0 0.0
        %584 = vmatprep.subr.mxu0 0.0
        %585 = vmatpush1.msra.mxu0 0.0
        %586 = vmatprep.subr.mxu0 0.0
        %587 = vmatpush1.msra.mxu0 0.0
        %588 = vmatprep.subr.mxu0 0.0
        %589 = vmatpush1.msra.mxu0 0.0
        %590 = vmatprep.subr.mxu0 0.0
        %591 = vmatpush1.msra.mxu0 0.0
        %592 = vmatprep.subr.mxu0 0.0
        %593 = vmatpush1.msra.mxu0 0.0
        %594 = vmatprep.subr.mxu0 0.0
        %595 = vmatpush1.msra.mxu0 0.0
        %596 = vmatprep.subr.mxu0 0.0
        %597 = vmatpush1.msra.mxu0 0.0
        %598 = vmatprep.subr.mxu0 0.0
        %599 = vmatpush1.msra.mxu0 0.0
        %600 = vmatprep.subr.mxu0 0.0
        %601 = vmatpush1.msra.mxu0 0.0
        %602 = vmatprep.subr.mxu0 0.0
        %603 = vmatpush1.msra.mxu0 0.0
        %604 = vmatprep.mubr.f32.mxu0 0.0
        %605 = vmatmul.mubr.f32.gmra.mrb[0].mxu0 %v538
        %v606 = vpop.f32.mrb[0].mxu0
        %v607 = vadd.f32 %v535, %v606
        %v608 = vpop.f32.mrb[0].mxu0
        %609 = vdwg.mxu0
        %vm610 = vcmask 122880
        %611 = vst.msk [vmem:[%s258] sm:$0x1] %vm610, %v607
        %s612 = sand.u32 %s164, 1
        %s613 = scalar_lea.sflag [#allocation3], %s612
        %s614 = sand.u32 %s164, 1
        %s615 = scalar_lea.vmem [#allocation2], %s614
        // Predicated region
        $region45: #{tpu_custom_call.1} parent=43 // pred_check
          %p616 = pneg %p174
        $region46: #{tpu_custom_call.1} parent=43 // pred_check_branch
          %618 = sbr.rel (%p616) target = $region48
        $region47: #{tpu_custom_call.1} parent=43 // pred_region
          %s620 = ssub.s32 16, 16
          %621 = vsyncadd %s613, %s620
          %s622 = smul.addr %s20, 16
          %s623 = scalar_lea.hbm %s6, %s622
          %s625 = sshll.u32 %s615, 4
          %s626 = int_to_ptr.vmem [resolvable:$true] %s625
          %628 = dma.vmem_to_hbm [thread:$0]  %s626, 16, %s623, %s613
        $region48: #{tpu_custom_call.1} parent=43 // pred_fallthru
          _
      $region44: #{tpu_custom_call.1} parent=5 // pred_fallthru
        _
      %p629 = scmp.le.s32.totalorder 2, %s15
      // Predicated region
      $region49: #{tpu_custom_call.1} parent=5 // pred_check
        %p630 = pneg %p629
      $region50: #{tpu_custom_call.1} parent=5 // pred_check_branch
        %632 = sbr.rel (%p630) target = $region52
      $region51: #{tpu_custom_call.1} parent=5 // pred_region
        %s633 = ssub.s32 %s15, 2
        // Predicated region
        $region53: #{tpu_custom_call.1} parent=51 // pred_check
          %p634 = pneg %p180
        $region54: #{tpu_custom_call.1} parent=51 // pred_check_branch
          %636 = sbr.rel (%p634) target = $region56
        $region55: #{tpu_custom_call.1} parent=51 // pred_region
          %s637 = sand.u32 %s165, 1
          %s638 = scalar_lea.sflag [#allocation3], %s637
          %s639 = sand.u32 %s165, 1
          %s640 = scalar_lea.vmem [#allocation2], %s639
          %641 = dma.done %s638, 16
        $region56: #{tpu_custom_call.1} parent=51 // pred_fallthru
          _
      $region52: #{tpu_custom_call.1} parent=5 // pred_fallthru
        _
    $region6: #{tpu_custom_call.1} parent=1 // loop_footer
      %s19 = sadd.s32 1, %s15
    $region7: #{tpu_custom_call.1} parent=1 // loop_footer_branch
      %14 = sbr.rel target = $region3
    $region8: #{tpu_custom_call.1} parent=1 // loop_exit
      _
    %642 = vsyncpa [#allocation3], 1
    %s643 = scalar_lea.sflag [#allocation3], 1
    %644 = vsyncpa %s643, 1

</llo_original>
